<compile_context>
chip_gen: v7x
topology: tpu7x:2x2x1
jax: 0.10.0
libtpu: 0.0.40
codegen_flags: <defaults>
</compile_context>

<pallas_src>
import functools

import jax
import jax.numpy as jnp
from jax.experimental import pallas as pl
from jax.experimental.pallas import tpu as pltpu


def _bce_with_logits(x, y):
    # Numerically-stable elementwise BCE-with-logits, identical to
    # F.binary_cross_entropy_with_logits (reduction handled by caller):
    #   max(x, 0) - x*y + log1p(exp(-|x|))
    return jnp.maximum(x, 0.0) - x * y + jnp.log1p(jnp.exp(-jnp.abs(x)))


def _make_adapter_loss_kernel(n, use_bce, use_rank, use_reg,
                              bce_weight, rnk_weight, reg_weight):
    """Builds a kernel closed over static N, component set and weights."""
    inv_n = 1.0 / float(n)
    inv_n2 = 1.0 / float(n * n)

    def kernel(rows_ref, out_ref):
        # rows_ref: (2, N) f32 in VMEM.  Row 0 = y_preds, row 1 = y_trues.
        preds_row = rows_ref[0:1, :]        # (1, N), static sublane slice
        trues_row = rows_ref[1:2, :]        # (1, N)

        total = jnp.float32(0.0)

        # --- 'bce': BCE-with-logits(preds, 1[trues != 0]), mean over N ---
        if use_bce:
            y_bin = jnp.where(trues_row == 0.0, 0.0, 1.0)
            bce = jnp.sum(_bce_with_logits(preds_row, y_bin)) * inv_n
            total = total + bce_weight * bce

        # --- 'rank': pairwise BCE-with-logits over ALL N*N pairs
        #     (diagonal included, each contributing log 2 — matches torch). ---
        if use_rank:
            # Derive the (N, 1) column views from the (1, N) rows with a
            # masked lane-reduction (identity select + axis=-1 sum).  This is
            # a lane->sublane swap done on the otherwise-idle XLU and avoids
            # relying on small-shape transpose/reshape lowering.
            row_ids = jax.lax.broadcasted_iota(jnp.int32, (n, n), 0)
            col_ids = jax.lax.broadcasted_iota(jnp.int32, (n, n), 1)
            eye = row_ids == col_ids
            preds_col = jnp.sum(jnp.where(eye, preds_row, 0.0),
                                axis=1, keepdims=True)        # (N, 1)
            trues_col = jnp.sum(jnp.where(eye, trues_row, 0.0),
                                axis=1, keepdims=True)        # (N, 1)

            d_pred = preds_col - preds_row    # (N, N): preds[i] - preds[j]
            d_true = trues_col - trues_row    # (N, N): trues[i] - trues[j]
            t_pair = jnp.where(d_true > 0.0, 1.0, 0.0)
            rank = jnp.sum(_bce_with_logits(d_pred, t_pair)) * inv_n2
            total = total + rnk_weight * rank

        # --- 'regression': log(smooth_l1(preds, trues) + 1), beta=1 ---
        if use_reg:
            diff = preds_row - trues_row
            a = jnp.abs(diff)
            sl1 = jnp.where(a < 1.0, 0.5 * a * a, a - 0.5)
            reg = jnp.log(jnp.sum(sl1) * inv_n + 1.0)
            total = total + reg_weight * reg

        out_ref[0] = total

    return kernel


@functools.partial(jax.jit, static_argnames=("loss_components",))
def _clip_with_adapter_loss_jit(adapter_logits, adapter_targets,
                                loss_components):
    # Torch-equivalent views, fused inside this jit and stacked into a single
    # (2, N) f32 operand (one DMA instead of two):
    #   row 0: y_preds = adapter_logits[:, 0].view(1, -1)
    #   row 1: y_trues = adapter_targets.view(1, -1)
    # NOTE: assumes adapter_logits has a single head (N, 1), as stated in the
    # module docstring, so adapter_logits[:, 0] == adapter_logits.view(-1).
    y_preds = adapter_logits[:, 0].reshape(1, -1).astype(jnp.float32)
    y_trues = adapter_targets.reshape(1, -1).astype(jnp.float32)
    n = y_preds.shape[-1]
    if n < 1:
        raise ValueError("ClipWithAdapterLoss requires a non-empty adapter batch")
    rows = jnp.concatenate([y_preds, y_trues], axis=0)        # (2, N)

    kernel = _make_adapter_loss_kernel(
        n,
        use_bce='bce' in loss_components,
        use_rank='rank' in loss_components,
        use_reg='regression' in loss_components,
        bce_weight=1.0, rnk_weight=1.0, reg_weight=0.2)

    vmem = pl.BlockSpec(memory_space=pltpu.MemorySpace.VMEM)
    smem = pl.BlockSpec(memory_space=pltpu.MemorySpace.SMEM)

    adapter_loss = pl.pallas_call(
        kernel,
        out_shape=jax.ShapeDtypeStruct((1,), jnp.float32),
        in_specs=[vmem],
        out_specs=smem,
    )(rows)[0]

    clip_loss = jnp.float32(0.0)
    # TODO(synk): NaN debug print of y_trues/y_preds omitted (no clean in-kernel printf path in prod).
    return clip_loss, adapter_loss


def clip_with_adapter_loss(image_features, text_features, logit_scale,
                           adapter_logits, adapter_targets,
                           loss_components=('rank',), output_dict=False):
    # image_features / text_features / logit_scale are unused by the reference
    # forward (clip_loss is a constant 0.0).
    del image_features, text_features, logit_scale

    clip_loss, adapter_loss = _clip_with_adapter_loss_jit(
        adapter_logits, adapter_targets, tuple(loss_components))

    if output_dict:
        return {'contrastive_loss': clip_loss, 'adapter_loss': adapter_loss}
    return clip_loss, adapter_loss


# ---------------------------------------------------------------------------
# Pure-JAX reference (mirrors the torch forward) for a correctness check.
# ---------------------------------------------------------------------------
def _reference_adapter_loss(adapter_logits, adapter_targets, loss_components):
    y_preds = adapter_logits[:, 0].reshape(1, -1).astype(jnp.float32)
    y_trues = adapter_targets.reshape(1, -1).astype(jnp.float32)
    loss = jnp.float32(0.0)
    if 'bce' in loss_components:
        y_bin = jnp.where(y_trues == 0.0, 0.0, 1.0)
        loss = loss + 1.0 * jnp.mean(_bce_with_logits(y_preds, y_bin))
    if 'rank' in loss_components:
        p = y_preds.reshape(-1)
        t = y_trues.reshape(-1)
        d_pred = p[:, None] - p[None, :]
        d_true = t[:, None] - t[None, :]
        tgt = jnp.where(d_true > 0.0, 1.0, 0.0)
        loss = loss + 1.0 * jnp.mean(_bce_with_logits(d_pred, tgt))
    if 'regression' in loss_components:
        diff = jnp.abs(y_preds - y_trues)
        sl1 = jnp.where(diff < 1.0, 0.5 * diff * diff, diff - 0.5)
        loss = loss + 0.2 * jnp.log(jnp.mean(sl1) + 1.0)
    return loss


if __name__ == "__main__":
    key = jax.random.PRNGKey(0)
    k1, k2, k3, k4 = jax.random.split(key, 4)

    N, D = 8, 32
    image_features = jax.random.normal(k1, (N, D), dtype=jnp.float32)
    text_features = jax.random.normal(k2, (N, D), dtype=jnp.float32)
    logit_scale = jnp.float32(14.2857)                     # ~ exp(2.659) as in CLIP
    adapter_logits = jax.random.normal(k3, (N, 1), dtype=jnp.float32)
    adapter_targets = jax.random.randint(k4, (N, 1), 0, 5).astype(jnp.float32)

    # Default module config (loss_components=['rank'])
    clip_loss, adapter_loss = clip_with_adapter_loss(
        image_features, text_features, logit_scale,
        adapter_logits, adapter_targets, loss_components=('rank',))
    jax.block_until_ready(adapter_loss)
    ref = _reference_adapter_loss(adapter_logits, adapter_targets, ('rank',))
    assert abs(float(adapter_loss) - float(ref)) < 2e-3, (adapter_loss, ref)
    assert float(clip_loss) == 0.0

    # All components, dict output
    comps = ('bce', 'rank', 'regression')
    out = clip_with_adapter_loss(
        image_features, text_features, logit_scale,
        adapter_logits, adapter_targets,
        loss_components=comps, output_dict=True)
    jax.block_until_ready(out['adapter_loss'])
    ref_all = _reference_adapter_loss(adapter_logits, adapter_targets, comps)
    assert abs(float(out['adapter_loss']) - float(ref_all)) < 2e-3, (
        out['adapter_loss'], ref_all)

    print("KERNEL_OK")
</pallas_src>

<mosaic_0001>
module attributes {stable_mosaic.version = 11 : i64} {
  func.func @kernel(%arg0: memref<2x8xf32, #tpu.memory_space<vmem>>, %arg1: memref<1xf32, #tpu.memory_space<smem>>) attributes {dimension_semantics = [], scalar_prefetch = 0 : i64, scratch_operands = 0 : i64, tpu.core_type = #tpu.core_type<tc>} {
    %c0 = arith.constant 0 : index
    %c0_0 = arith.constant 0 : index
    %0 = vector.load %arg0[%c0, %c0_0] : memref<2x8xf32, #tpu.memory_space<vmem>>, vector<1x8xf32>
    %c1 = arith.constant 1 : index
    %c0_1 = arith.constant 0 : index
    %1 = vector.load %arg0[%c1, %c0_1] : memref<2x8xf32, #tpu.memory_space<vmem>>, vector<1x8xf32>
    %2 = tpu.iota {dimensions = array<i32: 0>} : vector<8x8xi32>
    %3 = tpu.iota {dimensions = array<i32: 1>} : vector<8x8xi32>
    %4 = arith.cmpi eq, %2, %3 : vector<8x8xi32>
    %cst = arith.constant 0.000000e+00 : f32
    %5 = vector.shape_cast %0 : vector<1x8xf32> to vector<1x8xf32>
    %6 = vector.broadcast %5 : vector<1x8xf32> to vector<8x8xf32>
    %7 = vector.broadcast %cst : f32 to vector<8x8xf32>
    %8 = arith.select %4, %6, %7 : vector<8x8xi1>, vector<8x8xf32>
    %cst_2 = arith.constant dense<0.000000e+00> : vector<8xf32>
    %9 = vector.multi_reduction <add>, %8, %cst_2 [1] : vector<8x8xf32> to vector<8xf32>
    %10 = vector.shape_cast %9 : vector<8xf32> to vector<8x1xf32>
    %cst_3 = arith.constant 0.000000e+00 : f32
    %11 = vector.shape_cast %1 : vector<1x8xf32> to vector<1x8xf32>
    %12 = vector.broadcast %11 : vector<1x8xf32> to vector<8x8xf32>
    %13 = vector.broadcast %cst_3 : f32 to vector<8x8xf32>
    %14 = arith.select %4, %12, %13 : vector<8x8xi1>, vector<8x8xf32>
    %cst_4 = arith.constant dense<0.000000e+00> : vector<8xf32>
    %15 = vector.multi_reduction <add>, %14, %cst_4 [1] : vector<8x8xf32> to vector<8xf32>
    %16 = vector.shape_cast %15 : vector<8xf32> to vector<8x1xf32>
    %17 = vector.broadcast %10 : vector<8x1xf32> to vector<8x8xf32>
    %18 = vector.broadcast %0 : vector<1x8xf32> to vector<8x8xf32>
    %19 = arith.subf %17, %18 : vector<8x8xf32>
    %20 = vector.broadcast %16 : vector<8x1xf32> to vector<8x8xf32>
    %21 = vector.broadcast %1 : vector<1x8xf32> to vector<8x8xf32>
    %22 = arith.subf %20, %21 : vector<8x8xf32>
    %cst_5 = arith.constant 0.000000e+00 : f32
    %23 = vector.broadcast %cst_5 : f32 to vector<8x8xf32>
    %24 = arith.cmpf ogt, %22, %23 : vector<8x8xf32>
    %cst_6 = arith.constant 1.000000e+00 : f32
    %cst_7 = arith.constant 0.000000e+00 : f32
    %25 = vector.broadcast %cst_6 : f32 to vector<8x8xf32>
    %26 = vector.broadcast %cst_7 : f32 to vector<8x8xf32>
    %27 = arith.select %24, %25, %26 : vector<8x8xi1>, vector<8x8xf32>
    %cst_8 = arith.constant 0.000000e+00 : f32
    %28 = vector.broadcast %cst_8 : f32 to vector<8x8xf32>
    %29 = arith.maximumf %19, %28 : vector<8x8xf32>
    %30 = arith.mulf %19, %27 : vector<8x8xf32>
    %31 = arith.subf %29, %30 : vector<8x8xf32>
    %32 = math.absf %19 : vector<8x8xf32>
    %cst_9 = arith.constant 0.000000e+00 : f32
    %33 = vector.broadcast %cst_9 : f32 to vector<8x8xf32>
    %34 = arith.subf %33, %32 : vector<8x8xf32>
    %35 = math.exp %34 : vector<8x8xf32>
    %36 = math.log1p %35 : vector<8x8xf32>
    %37 = arith.addf %31, %36 : vector<8x8xf32>
    %38 = vector.shape_cast %37 : vector<8x8xf32> to vector<1x8x8xf32>
    %cst_10 = arith.constant dense<0.000000e+00> : vector<1xf32>
    %39 = vector.multi_reduction <add>, %38, %cst_10 [1, 2] : vector<1x8x8xf32> to vector<1xf32>
    %40 = vector.shape_cast %39 : vector<1xf32> to vector<1x1x1xf32>
    %41 = vector.extract %40[0, 0, 0] : f32 from vector<1x1x1xf32>
    %cst_11 = arith.constant 1.562500e-02 : f32
    %42 = arith.mulf %41, %cst_11 : f32
    %cst_12 = arith.constant 1.000000e+00 : f32
    %43 = arith.mulf %cst_12, %42 : f32
    %cst_13 = arith.constant 0.000000e+00 : f32
    %44 = arith.addf %cst_13, %43 : f32
    %c0_14 = arith.constant 0 : index
    %45 = memref.load %arg1[%c0_14] : memref<1xf32, #tpu.memory_space<smem>>
    memref.store %44, %arg1[%c0_14] : memref<1xf32, #tpu.memory_space<smem>>
    return
  }
}

</mosaic_0001>

<llo_original>
// kernel: _clip_with_adapter_loss_jit.1
$region0: #{_clip_with_adapter_loss_jit.1}
  #allocation0 [shape = 'u32[]', space=smem, size = 0x4, offset = 0x4, fixed_abs, tag = 'smem constant byte address 0x4 - core index']
  #allocation1 [shape = 'u32[144,128]{1,0:T(1,128)}', space=vmem, size = 0x12000, scoped, tag = 'internal scratch']
  %s0 = inlined_call_operand.vmem [shape: f32[2,8], index: 0, kind: input, shape index: {}]
  %s1 = inlined_call_operand.hbm [shape: f32[1], index: 1, kind: output, shape index: {}]
  %s2 = sld [smem:[#allocation0]]
  $region14: #{_clip_with_adapter_loss_jit.1} parent=0
    _
  %s4 = ssub.s32 1, %s2
  %s5 = scalar_select 0, %s4, %s2
  $region1: #{_clip_with_adapter_loss_jit.1} parent=0
    #allocation2 [shape = 'u8[512]{0}', space=smem, size = 0x200, scoped, tag = 'output window, operand 0, single buffered']
    #allocation3 [shape = 's32[1]{0}', space=sflag, size = 0x4, scoped, tag = 'scoped memory for _clip_with_adapter_loss_jit.1']
    %6 = vsyncpa [#allocation3], 0
    // Predicated region
    $region2: #{_clip_with_adapter_loss_jit.1} parent=1 // pred_check
      _
    $region3: #{_clip_with_adapter_loss_jit.1} parent=1 // pred_check_branch
      %8 = sbr.rel (0) target = $region5
    $region4: #{_clip_with_adapter_loss_jit.1} parent=1 // pred_region
      _
    $region5: #{_clip_with_adapter_loss_jit.1} parent=1 // pred_fallthru
      _
    %v9 = vld [vmem:[%s0] sm:$0x1]
    %v10 = vld [vmem:[%s0 + $0x1] sm:$0x1]
    %v11 = vlaneseq
    %v12 = vshrl.u32 %v11, 7
    %v13 = vlaneseq
    %v14 = vand.u32 %v13, 127
    %vm15 = vcmp.eq.s32.totalorder %v12, %v14
    %v16 = vlaneseq
    %v17 = vshrl.u32 %v16, 7
    %v18 = vsub.s32 0, %v17
    %v19 = vrot.slane %v9, %v18
    %v20 = vsel %vm15, %v19, 0.0
    %vm21 = vcmask 64512
    %v22 = vsel %vm21, %v20, 0.0
    %23 = vadd.xlane.f32.xlu0 %v22
    %v24 = vpop.xlane.xlu0 %23
    %v25 = vlaneseq
    %v26 = vshrl.u32 %v25, 7
    %v27 = vsub.s32 0, %v26
    %v28 = vrot.slane %v10, %v27
    %v29 = vsel %vm15, %v28, 0.0
    %v30 = vsel %vm21, %v29, 0.0
    %31 = vadd.xlane.f32.xlu0 %v30
    %v32 = vpop.xlane.xlu0 %31
    %v33 = vsub.f32 %v24, %v19
    %v34 = vsub.f32 %v32, %v28
    %vm35 = vcmp.gt.f32.partialorder %v34, 0.0
    %v36 = vsel %vm35, 1.0, 0.0
    %v37 = vmax.f32 %v33, 0.0
    %v38 = vmul.f32 %v33, %v36
    %v39 = vsub.f32 %v37, %v38
    %v40 = vand.u32 2147483647, %v33
    %v41 = vsub.f32 0.0, %v40
    %v42 = vmul.f32 %v41, 1.442695
    %v43 = vpow.pop %v42
    %v44 = vadd.f32 %v43, 1.0
    %v45 = vlog2.pop %v44
    %v46 = vmul.f32 %v45, 0.6931472
    %v47 = vmul.f32 -0.5, %v43
    %v48 = vadd.f32 %v47, 1.0
    %v49 = vmul.f32 %v48, %v43
    %v50 = vand.u32 2147483647, %v43
    %vm51 = vcmp.lt.f32.partialorder %v50, 0.0004427343
    %v52 = vsel %vm51, %v49, %v46
    %v53 = vadd.f32 %v39, %v52
    %v54 = vsel %vm21, %v53, 0.0
    %55 = vadd.xlane.f32.xlu0 %v54
    %v56 = vpop.xlane.xlu0 %55
    %v57 = vrot.slane %v56, 4
    %v58 = vadd.f32 %v56, %v57
    %v59 = vrot.slane %v58, 2
    %v60 = vadd.f32 %v58, %v59
    %v61 = vrot.slane %v60, 1
    %v62 = vadd.f32 %v60, %v61
    %s63 = vtos %v62
    %s64 = smul.f32 %s63, 0.015625
    %s65 = sadd.f32 %s64, 0.0
    %s66 = scalar_lea.smem [#allocation2], 0
    %67 = sst [smem:[%s66]] %s65
    // Predicated region
    $region6: #{_clip_with_adapter_loss_jit.1} parent=1 // pred_check
      _
    $region7: #{_clip_with_adapter_loss_jit.1} parent=1 // pred_check_branch
      %69 = sbr.rel (0) target = $region9
    $region8: #{_clip_with_adapter_loss_jit.1} parent=1 // pred_region
      %s71 = ssub.s32 16, 16
      %72 = vsyncadd [#allocation3], %s71
      %75 = dma.smem_to_hbm [#allocation2], 16, %s1, [#allocation3]
    $region9: #{_clip_with_adapter_loss_jit.1} parent=1 // pred_fallthru
      _
    // Predicated region
    $region10: #{_clip_with_adapter_loss_jit.1} parent=1 // pred_check
      _
    $region11: #{_clip_with_adapter_loss_jit.1} parent=1 // pred_check_branch
      %77 = sbr.rel (0) target = $region13
    $region12: #{_clip_with_adapter_loss_jit.1} parent=1 // pred_region
      %78 = dma.done [#allocation3], 16
    $region13: #{_clip_with_adapter_loss_jit.1} parent=1 // pred_fallthru
      _
    %79 = sfence
    %80 = vsyncpa [#allocation3], 1

</llo_original>
